<compile_context>
chip_gen: v6e
topology: v6e:2x2x1
jax: 0.10.0
libtpu: 0.0.40
codegen_flags: <defaults>
</compile_context>

<pallas_src>
import functools

import jax
import jax.numpy as jnp
from jax.experimental import pallas as pl
from jax.experimental.pallas import tpu as pltpu


def _weighted_sum_kernel(w_ref, *refs, n_inputs):
    # w_ref: SMEM (N,) scalar weights (scalar-prefetched)
    # refs[:n_inputs]: VMEM (tr, lane) tiles, one per embedding
    # refs[n_inputs]:  VMEM (tr, lane) output tile
    x_refs = refs[:n_inputs]
    o_ref = refs[n_inputs]

    # Hoist scalar SMEM reads out of the accumulation chain.
    ws = [w_ref[i] for i in range(n_inputs)]

    acc = x_refs[0][...].astype(jnp.float32) * ws[0]
    for i in range(1, n_inputs):  # static unroll; N is small
        acc = acc + x_refs[i][...].astype(jnp.float32) * ws[i]
    o_ref[...] = acc.astype(o_ref.dtype)


def _round_up(x, m):
    return ((x + m - 1) // m) * m


def _pick_lane(total):
    """Largest multiple of 128 (<= 2048) that divides `total`."""
    for lane in (2048, 1024, 512, 256, 128):
        if total % lane == 0:
            return lane
    return 128  # callers only pass 128-aligned totals


def _choose_row_tile(rows, lane, n_inputs, itemsize, vmem_budget_bytes):
    """Row tile: fits the double-buffered VMEM budget, multiple of the dtype's
    native sublane tile, and (when possible) yields >= 2 grid blocks so v7x's
    two TensorCores both get work."""
    mult = max(8, 32 // itemsize)  # 8 for f32, 16 for bf16, 32 for int8/fp8
    denom = 2 * (n_inputs + 1) * lane * itemsize  # N inputs + 1 output, 2 bufs each
    max_tr = max(mult, vmem_budget_bytes // denom)
    tr = max(mult, min(2048, (max_tr // mult) * mult))

    if tr >= rows:
        # Whole array fits in one block; split in two for megacore if we can.
        if rows >= 2 * mult:
            return _round_up(pl.cdiv(rows, 2), mult)  # grid of exactly 2
        return rows  # full extent (always a legal block shape)

    # Budget-limited: grid already >= 2; best-effort make it even (never grow tr).
    g = pl.cdiv(rows, tr)
    if g > 1 and g % 2 == 1:
        cand = _round_up(pl.cdiv(rows, g + 1), mult)
        if mult <= cand <= tr:
            tr = cand
    return tr


def _pallas_weighted_sum(slabs, weights, vmem_budget_bytes):
    """slabs: list of N (rows, lane) arrays (lane % 128 == 0); weights: (N,) f32."""
    n_inputs = len(slabs)
    rows, lane = slabs[0].shape
    dtype = slabs[0].dtype
    itemsize = jnp.dtype(dtype).itemsize

    tr = _choose_row_tile(rows, lane, n_inputs, itemsize, vmem_budget_bytes)
    grid = (pl.cdiv(rows, tr),)

    footprint = 2 * (n_inputs + 1) * tr * lane * itemsize
    vmem_limit = max(16 * 1024 * 1024,
                     min(48 * 1024 * 1024, footprint + 8 * 1024 * 1024))

    total = rows * lane
    cost = pl.CostEstimate(
        flops=2 * n_inputs * total,
        bytes_accessed=(n_inputs + 1) * total * itemsize,
        transcendentals=0,
    )

    grid_spec = pltpu.PrefetchScalarGridSpec(
        num_scalar_prefetch=1,
        grid=grid,
        in_specs=[pl.BlockSpec((tr, lane), lambda i, w: (i, 0))
                  for _ in range(n_inputs)],
        out_specs=pl.BlockSpec((tr, lane), lambda i, w: (i, 0)),
    )

    return pl.pallas_call(
        functools.partial(_weighted_sum_kernel, n_inputs=n_inputs),
        out_shape=jax.ShapeDtypeStruct((rows, lane), dtype),
        grid_spec=grid_spec,
        compiler_params=pltpu.CompilerParams(
            dimension_semantics=("parallel",),  # lets v7x shard over its 2 TCs
            vmem_limit_bytes=vmem_limit,
        ),
        cost_estimate=cost,
    )(weights, *slabs)


def _jax_weighted_sum(parts, weights):
    acc = parts[0].astype(jnp.float32) * weights[0]
    for i in range(1, len(parts)):
        acc = acc + parts[i].astype(jnp.float32) * weights[i]
    return acc


def linear_weighted_avg(inputs, weights, *, vmem_budget_bytes=24 * 1024 * 1024):
    """inputs: list/tuple of N identically-shaped arrays.
       weights: N per-input scalars (list of (1,) params, (N,), or (N,1))."""
    inputs = list(inputs)
    n_inputs = len(inputs)
    orig_shape = inputs[0].shape
    dtype = inputs[0].dtype

    # PyTorch stores an nn.ParameterList of shape-(1,) params; normalize any of
    # (N,), (N,1), or a list of scalars to a flat f32 (N,) vector here so the
    # kernel's w_ref[i] indexing is always correct.
    weights = jnp.asarray(weights, dtype=jnp.float32).reshape(-1)
    if weights.shape[0] != n_inputs:
        raise ValueError(
            f"expected {n_inputs} scalar weights, got shape {weights.shape}")

    total = 1
    for s in orig_shape:
        total *= s

    if total % 128 == 0:
        # Clean path: free (bitcast) reshape to a lane-dense slab, no pad/slice.
        lane = _pick_lane(total)
        rows = total // lane
        slabs = [x.reshape(rows, lane) for x in inputs]
        out = _pallas_weighted_sum(slabs, weights, vmem_budget_bytes)
        return out.reshape(orig_shape).astype(dtype)

    # Misaligned element count: kernel handles the 128-aligned bulk, the
    # (< 128-element) tail is one tiny plain-JAX op.  No full-array padding.
    flats = [x.reshape(-1) for x in inputs]
    bulk = (total // 128) * 128
    if bulk == 0:
        out = _jax_weighted_sum(flats, weights).astype(dtype)
        return out.reshape(orig_shape)

    lane = _pick_lane(bulk)
    rows = bulk // lane
    slabs = [f[:bulk].reshape(rows, lane) for f in flats]
    out_bulk = _pallas_weighted_sum(slabs, weights, vmem_budget_bytes)
    out_tail = _jax_weighted_sum([f[bulk:] for f in flats], weights).astype(dtype)
    out = jnp.concatenate([out_bulk.reshape(-1), out_tail])
    return out.reshape(orig_shape).astype(dtype)


if __name__ == "__main__":
    key = jax.random.PRNGKey(0)
    n_inputs = 3
    B, T, D = 2, 8, 32  # small shapes consistent with the module's usage

    keys = jax.random.split(key, 2 * n_inputs)
    # Stand-in for the nn.ParameterList of torch.randn(1) parameters.
    weight_params = [jax.random.normal(keys[i], (1,), dtype=jnp.float32)
                     for i in range(n_inputs)]
    inputs = [jax.random.normal(keys[n_inputs + i], (B, T, D), dtype=jnp.float32)
              for i in range(n_inputs)]

    out = linear_weighted_avg(inputs, weight_params)
    out = jax.block_until_ready(out)

    # Plain-JAX reference (mirrors the PyTorch forward).
    ref = sum(inp * w[0] for inp, w in zip(inputs, weight_params))
    assert out.shape == (B, T, D)
    assert out.dtype == inputs[0].dtype
    assert jnp.allclose(out, ref, atol=1e-5, rtol=1e-5)

    print("KERNEL_OK")
</pallas_src>

<mosaic_0001>
module attributes {stable_mosaic.version = 11 : i64} {
  func.func @_weighted_sum_kernel(%arg0: i32, %arg1: memref<3xf32, #tpu.memory_space<smem>>, %arg2: memref<1x512xf32, #tpu.memory_space<vmem>>, %arg3: memref<1x512xf32, #tpu.memory_space<vmem>>, %arg4: memref<1x512xf32, #tpu.memory_space<vmem>>, %arg5: memref<1x512xf32, #tpu.memory_space<vmem>>) attributes {dimension_semantics = [#tpu.dimension_semantics<parallel>], iteration_bounds = array<i64: 1>, scalar_prefetch = 1 : i64, scratch_operands = 0 : i64, tpu.core_type = #tpu.core_type<tc>, window_params = [{transform_indices = @transform_0, window_bounds = array<i64: 1, 512>}, {transform_indices = @transform_1, window_bounds = array<i64: 1, 512>}, {transform_indices = @transform_2, window_bounds = array<i64: 1, 512>}, {transform_indices = @transform_3, window_bounds = array<i64: 1, 512>}]} {
    %c0 = arith.constant 0 : index
    %0 = memref.load %arg1[%c0] : memref<3xf32, #tpu.memory_space<smem>>
    %c1 = arith.constant 1 : index
    %1 = memref.load %arg1[%c1] : memref<3xf32, #tpu.memory_space<smem>>
    %c2 = arith.constant 2 : index
    %2 = memref.load %arg1[%c2] : memref<3xf32, #tpu.memory_space<smem>>
    %c0_0 = arith.constant 0 : index
    %c0_1 = arith.constant 0 : index
    %3 = vector.load %arg2[%c0_0, %c0_1] : memref<1x512xf32, #tpu.memory_space<vmem>>, vector<1x512xf32>
    %4 = vector.broadcast %0 : f32 to vector<1x512xf32>
    %5 = arith.mulf %3, %4 : vector<1x512xf32>
    %c0_2 = arith.constant 0 : index
    %c0_3 = arith.constant 0 : index
    %6 = vector.load %arg3[%c0_2, %c0_3] : memref<1x512xf32, #tpu.memory_space<vmem>>, vector<1x512xf32>
    %7 = vector.broadcast %1 : f32 to vector<1x512xf32>
    %8 = arith.mulf %6, %7 : vector<1x512xf32>
    %9 = arith.addf %5, %8 : vector<1x512xf32>
    %c0_4 = arith.constant 0 : index
    %c0_5 = arith.constant 0 : index
    %10 = vector.load %arg4[%c0_4, %c0_5] : memref<1x512xf32, #tpu.memory_space<vmem>>, vector<1x512xf32>
    %11 = vector.broadcast %2 : f32 to vector<1x512xf32>
    %12 = arith.mulf %10, %11 : vector<1x512xf32>
    %13 = arith.addf %9, %12 : vector<1x512xf32>
    %c0_6 = arith.constant 0 : index
    %c0_7 = arith.constant 0 : index
    %14 = vector.load %arg5[%c0_6, %c0_7] : memref<1x512xf32, #tpu.memory_space<vmem>>, vector<1x512xf32>
    tpu.vector_store %arg5[%c0_6, %c0_7], %13 {strides = array<i32>} : memref<1x512xf32, #tpu.memory_space<vmem>>, vector<1x512xf32>,
    return
  }
  func.func @transform_0(%arg0: i32, %arg1: memref<3xf32, #tpu.memory_space<smem>>) -> (i32, i32) {
    %c0_i32 = arith.constant 0 : i32
    %c0_i32_0 = arith.constant 0 : i32
    return %arg0, %c0_i32 : i32, i32
  }
  func.func @transform_1(%arg0: i32, %arg1: memref<3xf32, #tpu.memory_space<smem>>) -> (i32, i32) {
    %c0_i32 = arith.constant 0 : i32
    %c0_i32_0 = arith.constant 0 : i32
    return %arg0, %c0_i32 : i32, i32
  }
  func.func @transform_2(%arg0: i32, %arg1: memref<3xf32, #tpu.memory_space<smem>>) -> (i32, i32) {
    %c0_i32 = arith.constant 0 : i32
    %c0_i32_0 = arith.constant 0 : i32
    return %arg0, %c0_i32 : i32, i32
  }
  func.func @transform_3(%arg0: i32, %arg1: memref<3xf32, #tpu.memory_space<smem>>) -> (i32, i32) {
    %c0_i32 = arith.constant 0 : i32
    %c0_i32_0 = arith.constant 0 : i32
    return %arg0, %c0_i32 : i32, i32
  }
}

</mosaic_0001>

<llo_original>
// kernel: tpu_custom_call.1
$region0: #{tpu_custom_call.1}
  #allocation0 [shape = 'u32[]', space=smem, size = 0x4, offset = 0x4, fixed_abs, tag = 'smem constant byte address 0x4 - core index']
  #allocation1 [shape = 'u32[144,128]{1,0:T(1,128)}', space=vmem, size = 0x12000, scoped, tag = 'internal scratch']
  #allocation2 [shape = 's32[1]{0}', space=sflag, size = 0x4, scoped, tag = 'scoped memory for tpu_custom_call.1']
  #allocation3 [shape = 'u8[512]{0}', space=smem, size = 0x200, scoped, tag = 'prefetched SMEM operand 0']
  %s0 = inlined_call_operand.hbm [shape: f32[3], index: 0, kind: input, shape index: {}]
  %s1 = inlined_call_operand.hbm [shape: f32[1,512], index: 1, kind: input, shape index: {}]
  %s2 = inlined_call_operand.hbm [shape: f32[1,512], index: 2, kind: input, shape index: {}]
  %s3 = inlined_call_operand.vmem [shape: f32[1,512], index: 3, kind: input, shape index: {}]
  %s4 = inlined_call_operand.hbm [shape: f32[1,512], index: 4, kind: output, shape index: {}]
  %s5 = sld [smem:[#allocation0]]
  $region30: #{tpu_custom_call.1} parent=0
    _
  %s7 = ssub.s32 1, %s5
  %s8 = scalar_select 0, %s7, %s5
  %10 = dma.hbm_to_smem %s0, 16, [#allocation3], [#allocation2]
  %11 = dma.done [#allocation2], 16
  %12 = sfence
  $region1: #{tpu_custom_call.1} parent=0
    #allocation4 [shape = 'u8[2048]{0}', space=vmem, size = 0x800, scoped, tag = 'input window, operand 1, single buffered']
    #allocation5 [shape = 's32[1]{0}', space=sflag, size = 0x4, scoped, tag = 'scoped memory for tpu_custom_call.1']
    #allocation6 [shape = 's32[1]{0}', space=sflag, size = 0x4, scoped, tag = 'scoped memory for tpu_custom_call.1']
    #allocation7 [shape = 'u8[2048]{0}', space=vmem, size = 0x800, scoped, tag = 'input window, operand 2, single buffered']
    #allocation8 [shape = 's32[1]{0}', space=sflag, size = 0x4, scoped, tag = 'scoped memory for tpu_custom_call.1']
    #allocation9 [shape = 'u8[2048]{0}', space=vmem, size = 0x800, scoped, tag = 'output window, operand 0, single buffered']
    %13 = vsyncpa [#allocation5], 0
    %14 = vsyncpa [#allocation8], 0
    %15 = vsyncpa [#allocation6], 0
    // Predicated region
    $region2: #{tpu_custom_call.1} parent=1 // pred_check
      _
    $region3: #{tpu_custom_call.1} parent=1 // pred_check_branch
      %17 = sbr.rel (0) target = $region5
    $region4: #{tpu_custom_call.1} parent=1 // pred_region
      %s19 = ssub.s32 64, 64
      %20 = vsyncadd [#allocation5], %s19
      %s22 = sshll.u32 [#allocation4], 4
      %s23 = int_to_ptr.vmem [resolvable:$true] %s22
      %25 = dma.hbm_to_vmem [thread:$0]  %s1, 64, %s23, [#allocation5]
    $region5: #{tpu_custom_call.1} parent=1 // pred_fallthru
      _
    // Predicated region
    $region6: #{tpu_custom_call.1} parent=1 // pred_check
      _
    $region7: #{tpu_custom_call.1} parent=1 // pred_check_branch
      %27 = sbr.rel (0) target = $region9
    $region8: #{tpu_custom_call.1} parent=1 // pred_region
      %s29 = ssub.s32 64, 64
      %30 = vsyncadd [#allocation8], %s29
      %s32 = sshll.u32 [#allocation7], 4
      %s33 = int_to_ptr.vmem [resolvable:$true] %s32
      %35 = dma.hbm_to_vmem [thread:$0]  %s2, 64, %s33, [#allocation8]
    $region9: #{tpu_custom_call.1} parent=1 // pred_fallthru
      _
    // Predicated region
    $region10: #{tpu_custom_call.1} parent=1 // pred_check
      _
    $region11: #{tpu_custom_call.1} parent=1 // pred_check_branch
      %37 = sbr.rel (0) target = $region13
    $region12: #{tpu_custom_call.1} parent=1 // pred_region
      _
    $region13: #{tpu_custom_call.1} parent=1 // pred_fallthru
      _
    // Predicated region
    $region14: #{tpu_custom_call.1} parent=1 // pred_check
      _
    $region15: #{tpu_custom_call.1} parent=1 // pred_check_branch
      %39 = sbr.rel (0) target = $region17
    $region16: #{tpu_custom_call.1} parent=1 // pred_region
      %40 = dma.done [#allocation5], 64
    $region17: #{tpu_custom_call.1} parent=1 // pred_fallthru
      _
    // Predicated region
    $region18: #{tpu_custom_call.1} parent=1 // pred_check
      _
    $region19: #{tpu_custom_call.1} parent=1 // pred_check_branch
      %42 = sbr.rel (0) target = $region21
    $region20: #{tpu_custom_call.1} parent=1 // pred_region
      %43 = dma.done [#allocation8], 64
    $region21: #{tpu_custom_call.1} parent=1 // pred_fallthru
      _
    %s44 = sld [smem:[#allocation3]]
    %s45 = sld [smem:[#allocation3 + $0x1]]
    %s46 = sld [smem:[#allocation3 + $0x2]]
    %v47 = vld [vmem:[#allocation4] sm:$0xf]
    %v48 = vstv %s44
    %v49 = vmul.f32 %v47, %v48
    %v50 = vld [vmem:[#allocation7] sm:$0xf]
    %v51 = vstv %s45
    %v52 = vmul.f32 %v50, %v51
    %v53 = vadd.f32 %v49, %v52
    %v54 = vld [vmem:[%s3] sm:$0xf]
    %v55 = vstv %s46
    %v56 = vmul.f32 %v54, %v55
    %v57 = vadd.f32 %v53, %v56
    %v58 = vlaneseq
    %vm59 = vcmp.ge.s32.totalorder %v58, 0
    %vm60 = vcmp.lt.s32.totalorder %v58, 512
    %vm61 = vmand %vm59, %vm60
    %62 = vst.msk [vmem:[#allocation9] sm:$0xf] %vm61, %v57
    // Predicated region
    $region22: #{tpu_custom_call.1} parent=1 // pred_check
      _
    $region23: #{tpu_custom_call.1} parent=1 // pred_check_branch
      %64 = sbr.rel (0) target = $region25
    $region24: #{tpu_custom_call.1} parent=1 // pred_region
      %s66 = ssub.s32 64, 64
      %67 = vsyncadd [#allocation6], %s66
      %s69 = sshll.u32 [#allocation9], 4
      %s70 = int_to_ptr.vmem [resolvable:$true] %s69
      %72 = dma.vmem_to_hbm [thread:$0]  %s70, 64, %s4, [#allocation6]
    $region25: #{tpu_custom_call.1} parent=1 // pred_fallthru
      _
    // Predicated region
    $region26: #{tpu_custom_call.1} parent=1 // pred_check
      _
    $region27: #{tpu_custom_call.1} parent=1 // pred_check_branch
      %74 = sbr.rel (0) target = $region29
    $region28: #{tpu_custom_call.1} parent=1 // pred_region
      %75 = dma.done [#allocation6], 64
    $region29: #{tpu_custom_call.1} parent=1 // pred_fallthru
      _
    %76 = vsyncpa [#allocation5], 1
    %77 = vsyncpa [#allocation8], 1
    %78 = vsyncpa [#allocation6], 1

</llo_original>
